<compile_context>
chip_gen: v6e
topology: v6e:2x2x1
jax: 0.10.0
libtpu: 0.0.40
codegen_flags: <defaults>
</compile_context>

<pallas_src>
import functools

import jax
import jax.numpy as jnp
from jax.experimental import pallas as pl
from jax.experimental.pallas import tpu as pltpu


def _round_up(x, m):
    return (x + m - 1) // m * m


TM_CAP = 256                       # matmul-M row tile (v6e/v7x friendly)
TK_CAP = 512                       # encoder K-reduction tile
VMEM_LIMIT = 48 * 1024 * 1024      # explicit scoped-VMEM limit (headroom < 64 MiB v7x)


def _pad_rows_tile(n):
    """Pad a row count to (8 | TM_CAP) granularity; return (padded_n, row_tile)."""
    n_pad = _round_up(n, 8)
    if n_pad <= TM_CAP:
        return n_pad, n_pad
    return _round_up(n, TM_CAP), TM_CAP


def _pad_k_tile(k):
    """Pad a feature (K) dim to (128 | TK_CAP) granularity; return (padded_k, k_tile)."""
    k_pad = _round_up(k, 128)
    if k_pad <= TK_CAP:
        return k_pad, k_pad
    return _round_up(k, TK_CAP), TK_CAP


# ----------------------------------------------------------------------------
# Pallas kernels
# ----------------------------------------------------------------------------
def _encoder_kernel(x_ref, w_ref, b_ref, o_ref, acc_ref):
    """Collapsed encoder: out_tile = x_tile @ W_eff + b_eff, K-tiled with an
    f32 VMEM accumulator.  (The reference encoder is purely affine: Linear ->
    BN(eval) -> Linear -> BN(eval) -> Linear, folded once at pack time.)"""
    k = pl.program_id(1)

    @pl.when(k == 0)
    def _():
        acc_ref[...] = jnp.zeros_like(acc_ref)

    acc_ref[...] += jnp.dot(x_ref[...], w_ref[...],
                            preferred_element_type=jnp.float32)

    @pl.when(k == pl.num_programs(1) - 1)
    def _():
        o_ref[...] = (acc_ref[...] + b_ref[...]).astype(o_ref.dtype)


def encoder_forward(x_pad, w_eff, b_eff, tm, tk):
    """x_pad: (N_pad, K_pad) bf16; w_eff: (K_pad, DEC) bf16; b_eff: (1, DEC) f32.
    Returns (N_pad, DEC) bf16 (lane-dense)."""
    n, kdim = x_pad.shape
    dec = w_eff.shape[1]
    return pl.pallas_call(
        _encoder_kernel,
        out_shape=jax.ShapeDtypeStruct((n, dec), jnp.bfloat16),
        grid=(n // tm, kdim // tk),
        in_specs=[
            pl.BlockSpec((tm, tk), lambda i, k: (i, k)),
            pl.BlockSpec((tk, dec), lambda i, k: (k, 0)),
            pl.BlockSpec((1, dec), lambda i, k: (0, 0)),
        ],
        out_specs=pl.BlockSpec((tm, dec), lambda i, k: (i, 0)),
        scratch_shapes=[pltpu.VMEM((tm, dec), jnp.float32)],
        compiler_params=pltpu.CompilerParams(
            dimension_semantics=("parallel", "arbitrary"),
            vmem_limit_bytes=VMEM_LIMIT),
    )(x_pad, w_eff, b_eff)


def _mm_bias_kernel(a_ref, b_ref, bias_ref, o_ref, *, relu):
    """out_tile = act(a_tile @ B + bias).  Operands are pre-cast bf16 in the
    wrapper; accumulation is f32 on the MXU, epilogue f32 on the VPU."""
    out = jnp.dot(a_ref[...], b_ref[...],
                  preferred_element_type=jnp.float32) + bias_ref[...]
    if relu:
        out = jnp.maximum(out, 0.0)
    o_ref[...] = out.astype(o_ref.dtype)


def mm_bias(a, b, bias, *, relu, out_dtype, tm):
    """Row-tiled matmul + bias (+ optional ReLU).  a: (N_pad, K) bf16,
    b: (K, F) bf16 (resident), bias: (1, F) f32."""
    n, k = a.shape
    f = b.shape[1]
    return pl.pallas_call(
        functools.partial(_mm_bias_kernel, relu=relu),
        out_shape=jax.ShapeDtypeStruct((n, f), out_dtype),
        grid=(n // tm,),
        in_specs=[
            pl.BlockSpec((tm, k), lambda i: (i, 0)),
            pl.BlockSpec((k, f), lambda i: (0, 0)),
            pl.BlockSpec((1, f), lambda i: (0, 0)),
        ],
        out_specs=pl.BlockSpec((tm, f), lambda i: (i, 0)),
        compiler_params=pltpu.CompilerParams(
            dimension_semantics=("parallel",),
            vmem_limit_bytes=VMEM_LIMIT),
    )(a, b, bias)


def gcn2_forward(a_bf16, x_bf16, wg1, bg1, wg2, bg2, tm):
    """Both GraphConv layers (DGL norm='both' semantics, bias after aggregate):
       H1    = relu(A @ (X @ Wg1) + bg1)
       score = A @ (H1 @ Wg2) + bg2
    Four row-tiled pallas_calls; intermediates stay bf16 and lane-dense."""
    zeros_hid = jnp.zeros((1, wg1.shape[1]), jnp.float32)
    zeros_cls = jnp.zeros((1, wg2.shape[1]), jnp.float32)
    xw = mm_bias(x_bf16, wg1, zeros_hid, relu=False, out_dtype=jnp.bfloat16, tm=tm)
    h1 = mm_bias(a_bf16, xw, bg1, relu=True, out_dtype=jnp.bfloat16, tm=tm)
    # TODO(synk): Dropout(0.5) after the ReLU runs in eval mode (identity).
    hw = mm_bias(h1, wg2, zeros_cls, relu=False, out_dtype=jnp.bfloat16, tm=tm)
    score = mm_bias(a_bf16, hw, bg2, relu=False, out_dtype=jnp.float32, tm=tm)
    return score


# ----------------------------------------------------------------------------
# Parameter construction (deterministic, mirrors the PyTorch module's shapes)
# ----------------------------------------------------------------------------
def _fold_bn(gamma, beta, mean, var, eps=1e-5):
    scale = gamma / jnp.sqrt(var + eps)
    shift = beta - mean * scale
    return scale, shift


def init_params(key, input_dims, latent_dims, decoder_dim, hidden_feats, num_classes):
    params = {"encoders": []}
    for m, (in_dim, lat_dim) in enumerate(zip(input_dims, latent_dims)):
        keys = jax.random.split(jax.random.fold_in(key, m), 10)
        W1 = jax.random.normal(keys[0], (in_dim, 500), jnp.float32) * 0.05
        b1 = jax.random.normal(keys[1], (500,), jnp.float32) * 0.01
        g1 = 1.0 + 0.1 * jax.random.normal(keys[2], (500,), jnp.float32)
        be1 = 0.1 * jax.random.normal(keys[3], (500,), jnp.float32)
        bn1_scale, bn1_shift = _fold_bn(g1, be1, jnp.zeros((500,)), jnp.ones((500,)))

        W2 = jax.random.normal(keys[4], (500, lat_dim), jnp.float32) * 0.05
        b2 = jax.random.normal(keys[5], (lat_dim,), jnp.float32) * 0.01
        g2 = 1.0 + 0.1 * jax.random.normal(keys[6], (lat_dim,), jnp.float32)
        be2 = 0.1 * jax.random.normal(keys[7], (lat_dim,), jnp.float32)
        bn2_scale, bn2_shift = _fold_bn(g2, be2, jnp.zeros((lat_dim,)), jnp.ones((lat_dim,)))

        W3 = jax.random.normal(keys[8], (lat_dim, decoder_dim), jnp.float32) * 0.05
        b3 = jax.random.normal(keys[9], (decoder_dim,), jnp.float32) * 0.01

        params["encoders"].append(
            dict(W1=W1, b1=b1, bn1_scale=bn1_scale, bn1_shift=bn1_shift,
                 W2=W2, b2=b2, bn2_scale=bn2_scale, bn2_shift=bn2_shift,
                 W3=W3, b3=b3)
        )

    gk = jax.random.split(jax.random.fold_in(key, 1234), 4)
    params["Wg1"] = jax.random.normal(gk[0], (decoder_dim, hidden_feats), jnp.float32) * 0.1
    params["bg1"] = jax.random.normal(gk[1], (hidden_feats,), jnp.float32) * 0.01
    params["Wg2"] = jax.random.normal(gk[2], (hidden_feats, num_classes), jnp.float32) * 0.1
    params["bg2"] = jax.random.normal(gk[3], (num_classes,), jnp.float32) * 0.01
    # NOTE: self.batch_norms[0] exists in __init__ but is never used in forward().
    return params


def pack_params(params, input_dims, latent_dims, decoder_dim, hidden_feats, num_classes):
    """One-time fold/pad/cast.  Each encoder (all-affine) collapses to a single
    (in_dim, decoder_dim) matmul; GCN weights are lane-padded and bf16-cast."""
    DEC = _round_up(decoder_dim, 128)
    HID = _round_up(hidden_feats, 128)
    CLS = _round_up(num_classes, 128)

    def pad2(a, r, c):
        return jnp.pad(a, ((0, r - a.shape[0]), (0, c - a.shape[1])))

    encoders = []
    for p, in_dim in zip(params["encoders"], input_dims):
        # Layer 1 (Linear + eval-BN): y = x @ (W1*s1) + (b1*s1 + shift1)
        M1 = p["W1"] * p["bn1_scale"][None, :]
        c1 = p["b1"] * p["bn1_scale"] + p["bn1_shift"]
        # Layer 2 (Linear + eval-BN)
        M2 = p["W2"] * p["bn2_scale"][None, :]
        c2 = p["b2"] * p["bn2_scale"] + p["bn2_shift"]
        # Decoder Linear.  Whole chain is affine -> fold in f32, cast once.
        W_eff = M1 @ M2 @ p["W3"]                       # (in_dim, decoder_dim)
        b_eff = (c1 @ M2 + c2) @ p["W3"] + p["b3"]      # (decoder_dim,)

        in_pad, tk = _pad_k_tile(in_dim)
        encoders.append(dict(
            W=pad2(W_eff, in_pad, DEC).astype(jnp.bfloat16),
            b=pad2(b_eff.reshape(1, -1), 1, DEC).astype(jnp.float32),
            in_dim=in_dim, in_pad=in_pad, tk=tk,
        ))

    packed = {
        "encoders": encoders,
        "Wg1": pad2(params["Wg1"], DEC, HID).astype(jnp.bfloat16),
        "bg1": pad2(params["bg1"].reshape(1, -1), 1, HID).astype(jnp.float32),
        "Wg2": pad2(params["Wg2"], HID, CLS).astype(jnp.bfloat16),
        "bg2": pad2(params["bg2"].reshape(1, -1), 1, CLS).astype(jnp.float32),
        "DEC": DEC, "HID": HID, "CLS": CLS,
    }
    return packed


# ----------------------------------------------------------------------------
# GCN_MME forward
# ----------------------------------------------------------------------------
def gcn_mme_forward(a_norm, h_list, reindex_list, packed, num_classes):
    num_nodes = a_norm.shape[0]
    num_mod = len(h_list)
    DEC = packed["DEC"]

    node_features = jnp.zeros((num_nodes, DEC), jnp.float32)
    for i, h in enumerate(h_list):
        enc = packed["encoders"][i]
        n_valid, in_dim = h.shape
        n_pad, tm = _pad_rows_tile(n_valid)

        # Per-modality padding only (no max-over-modalities K stuffing).
        x = jnp.zeros((n_pad, enc["in_pad"]), jnp.bfloat16)
        x = x.at[:n_valid, :in_dim].set(h.astype(jnp.bfloat16))

        dec = encoder_forward(x, enc["W"], enc["b"], tm, enc["tk"])   # bf16
        dec = dec[:n_valid].astype(jnp.float32)
        # TODO(synk): Dropout(0.5) on the decoded features runs in eval mode (identity).

        n_missing = num_nodes - n_valid
        if n_missing > 0:
            # Median imputation for subjects missing in this modality (plain-JAX glue).
            # TODO(synk): jnp.median averages the two middle rows for even counts,
            # torch.median returns the lower one -> tiny mismatch possible there.
            med = jnp.median(dec, axis=0)
            dec = jnp.concatenate(
                [dec, jnp.broadcast_to(med[None, :], (n_missing, DEC))], axis=0)
        node_features = node_features + dec[reindex_list[i]]
    node_features = node_features / num_mod

    # GCN: pre-pad rows to the row-tile grid and pre-cast A / features to bf16
    # (the adjacency read is the memory-bound term; bf16 halves its HBM traffic
    # and VMEM residency, and removes any in-kernel N^2 cast).
    n_gcn, tm = _pad_rows_tile(num_nodes)
    a_pad = jnp.zeros((n_gcn, n_gcn), jnp.bfloat16)
    a_pad = a_pad.at[:num_nodes, :num_nodes].set(a_norm.astype(jnp.bfloat16))
    x_pad = jnp.zeros((n_gcn, DEC), jnp.bfloat16)
    x_pad = x_pad.at[:num_nodes].set(node_features.astype(jnp.bfloat16))

    score_pad = gcn2_forward(a_pad, x_pad, packed["Wg1"], packed["bg1"],
                             packed["Wg2"], packed["bg2"], tm)
    return score_pad[:num_nodes, :num_classes]


# ----------------------------------------------------------------------------
# Main
# ----------------------------------------------------------------------------
if __name__ == "__main__":
    key = jax.random.PRNGKey(0)

    # Small shapes consistent with the module
    num_nodes = 8
    input_dims = [32, 48]      # two omic modalities
    latent_dims = [16, 16]
    decoder_dim = 24
    hidden_feats = 32
    num_classes = 4

    params = init_params(key, input_dims, latent_dims, decoder_dim,
                         hidden_feats, num_classes)
    packed = pack_params(params, input_dims, latent_dims, decoder_dim,
                         hidden_feats, num_classes)

    # Modality inputs: modality 0 has all 8 subjects, modality 1 only 6
    # (the remaining 2 node rows are median-imputed, as in the reference).
    k0, k1 = jax.random.split(jax.random.fold_in(key, 99))
    h0 = jax.random.normal(k0, (num_nodes, input_dims[0]), jnp.float32)
    h1 = jax.random.normal(k1, (num_nodes - 2, input_dims[1]), jnp.float32)

    # Deterministic reindex permutations (subjects_list / ordered_nodes alignment).
    reindex0 = jnp.arange(num_nodes, dtype=jnp.int32)
    reindex1 = jnp.array([0, 1, 2, 6, 3, 4, 7, 5], dtype=jnp.int32)

    # Deterministic ring graph; symmetric adjacency, D^-1/2 A D^-1/2 normalization
    # (DGL GraphConv norm='both').  Every node has degree > 0, so no self-loops
    # are added (matches the in_degrees().sum() == 0 check).
    A = jnp.zeros((num_nodes, num_nodes), jnp.float32)
    for u in range(num_nodes):
        v = (u + 1) % num_nodes
        A = A.at[u, v].set(1.0).at[v, u].set(1.0)
    deg = A.sum(axis=1)
    d_inv_sqrt = 1.0 / jnp.sqrt(deg)
    a_norm = A * d_inv_sqrt[:, None] * d_inv_sqrt[None, :]

    score = gcn_mme_forward(a_norm, [h0, h1], [reindex0, reindex1],
                            packed, num_classes)
    score = jax.block_until_ready(score)
    assert score.shape == (num_nodes, num_classes)
    assert bool(jnp.all(jnp.isfinite(score)))
    print("KERNEL_OK")
</pallas_src>

<mosaic_0001>
module attributes {stable_mosaic.version = 11 : i64} {
  func.func @_encoder_kernel(%arg0: i32, %arg1: i32, %arg2: memref<8x128xbf16, #tpu.memory_space<vmem>>, %arg3: memref<128x128xbf16, #tpu.memory_space<vmem>>, %arg4: memref<1x128xf32, #tpu.memory_space<vmem>>, %arg5: memref<8x128xbf16, #tpu.memory_space<vmem>>, %arg6: memref<8x128xf32, #tpu.memory_space<vmem>>) attributes {dimension_semantics = [#tpu.dimension_semantics<parallel>, #tpu.dimension_semantics<arbitrary>], iteration_bounds = array<i64: 1, 1>, scalar_prefetch = 0 : i64, scratch_operands = 1 : i64, tpu.core_type = #tpu.core_type<tc>, window_params = [{transform_indices = @transform_0, window_bounds = array<i64: 8, 128>}, {transform_indices = @transform_1, window_bounds = array<i64: 128, 128>}, {pipeline_mode = #tpu.pipeline_mode<synchronous>, transform_indices = @transform_2, window_bounds = array<i64: 1, 128>}, {transform_indices = @transform_3, window_bounds = array<i64: 8, 128>}]} {
    %c0_i32 = arith.constant 0 : i32
    %0 = arith.cmpi eq, %arg1, %c0_i32 : i32
    %1 = arith.extui %0 : i1 to i32
    %c0_i32_0 = arith.constant 0 : i32
    %2 = arith.cmpi ne, %1, %c0_i32_0 : i32
    scf.if %2 {
      %cst_10 = arith.constant 0.000000e+00 : f32
      %12 = vector.broadcast %cst_10 : f32 to vector<8x128xf32>
      %c0_11 = arith.constant 0 : index
      %c0_12 = arith.constant 0 : index
      %13 = vector.load %arg6[%c0_11, %c0_12] : memref<8x128xf32, #tpu.memory_space<vmem>>, vector<8x128xf32>
      tpu.vector_store %arg6[%c0_11, %c0_12], %12 {strides = array<i32>} : memref<8x128xf32, #tpu.memory_space<vmem>>, vector<8x128xf32>,
    } else {
    }
    %c0 = arith.constant 0 : index
    %c0_1 = arith.constant 0 : index
    %3 = vector.load %arg6[%c0, %c0_1] : memref<8x128xf32, #tpu.memory_space<vmem>>, vector<8x128xf32>
    %c0_2 = arith.constant 0 : index
    %c0_3 = arith.constant 0 : index
    %4 = vector.load %arg2[%c0_2, %c0_3] : memref<8x128xbf16, #tpu.memory_space<vmem>>, vector<8x128xbf16>
    %c0_4 = arith.constant 0 : index
    %c0_5 = arith.constant 0 : index
    %5 = vector.load %arg3[%c0_4, %c0_5] : memref<128x128xbf16, #tpu.memory_space<vmem>>, vector<128x128xbf16>
    %cst = arith.constant dense<0.000000e+00> : vector<8x128xf32>
    %6 = tpu.matmul %4, %5, %cst {dimension_numbers = #tpu.dot_dimension_numbers<[1], [0], [0], [1], [0, 0, 1, 1], [], []>} : vector<8x128xbf16>, vector<128x128xbf16>, vector<8x128xf32> -> vector<8x128xf32>
    %7 = arith.addf %3, %6 : vector<8x128xf32>
    %c0_6 = arith.constant 0 : index
    %c0_7 = arith.constant 0 : index
    %8 = vector.load %arg6[%c0_6, %c0_7] : memref<8x128xf32, #tpu.memory_space<vmem>>, vector<8x128xf32>
    tpu.vector_store %arg6[%c0_6, %c0_7], %7 {strides = array<i32>} : memref<8x128xf32, #tpu.memory_space<vmem>>, vector<8x128xf32>,
    %c0_i32_8 = arith.constant 0 : i32
    %9 = arith.cmpi eq, %arg1, %c0_i32_8 : i32
    %10 = arith.extui %9 : i1 to i32
    %c0_i32_9 = arith.constant 0 : i32
    %11 = arith.cmpi ne, %10, %c0_i32_9 : i32
    scf.if %11 {
      %c0_10 = arith.constant 0 : index
      %c0_11 = arith.constant 0 : index
      %12 = vector.load %arg6[%c0_10, %c0_11] : memref<8x128xf32, #tpu.memory_space<vmem>>, vector<8x128xf32>
      %c0_12 = arith.constant 0 : index
      %c0_13 = arith.constant 0 : index
      %13 = vector.load %arg4[%c0_12, %c0_13] : memref<1x128xf32, #tpu.memory_space<vmem>>, vector<1x128xf32>
      %14 = vector.broadcast %13 : vector<1x128xf32> to vector<8x128xf32>
      %15 = arith.addf %12, %14 : vector<8x128xf32>
      %16 = arith.truncf %15 : vector<8x128xf32> to vector<8x128xbf16>
      %c0_14 = arith.constant 0 : index
      %c0_15 = arith.constant 0 : index
      %17 = vector.load %arg5[%c0_14, %c0_15] : memref<8x128xbf16, #tpu.memory_space<vmem>>, vector<8x128xbf16>
      tpu.vector_store %arg5[%c0_14, %c0_15], %16 {strides = array<i32>} : memref<8x128xbf16, #tpu.memory_space<vmem>>, vector<8x128xbf16>,
    } else {
    }
    return
  }
  func.func @transform_0(%arg0: i32, %arg1: i32) -> (i32, i32) {
    %c0_i32 = arith.constant 0 : i32
    return %arg0, %arg1 : i32, i32
  }
  func.func @transform_1(%arg0: i32, %arg1: i32) -> (i32, i32) {
    %c0_i32 = arith.constant 0 : i32
    %c0_i32_0 = arith.constant 0 : i32
    return %arg1, %c0_i32 : i32, i32
  }
  func.func @transform_2(%arg0: i32, %arg1: i32) -> (i32, i32) {
    %c0_i32 = arith.constant 0 : i32
    %c0_i32_0 = arith.constant 0 : i32
    %c0_i32_1 = arith.constant 0 : i32
    return %c0_i32, %c0_i32_0 : i32, i32
  }
  func.func @transform_3(%arg0: i32, %arg1: i32) -> (i32, i32) {
    %c0_i32 = arith.constant 0 : i32
    %c0_i32_0 = arith.constant 0 : i32
    return %arg0, %c0_i32 : i32, i32
  }
}

</mosaic_0001>

<llo_original>
// kernel: tpu_custom_call.1
$region0: #{tpu_custom_call.1}
  #allocation0 [shape = 'u32[]', space=smem, size = 0x4, offset = 0x4, fixed_abs, tag = 'smem constant byte address 0x4 - core index']
  #allocation1 [shape = 'u32[144,128]{1,0:T(1,128)}', space=vmem, size = 0x12000, scoped, tag = 'internal scratch']
  #allocation2 [shape = 'f32[8,128]{1,0:T(8,128)}', space=vmem, size = 0x1000, scoped, tag = 'scratch operand']
  %s0 = inlined_call_operand.hbm [shape: bf16[8,128], index: 0, kind: input, shape index: {}]
  %s1 = inlined_call_operand.hbm [shape: bf16[128,128], index: 1, kind: input, shape index: {}]
  %s2 = inlined_call_operand.vmem [shape: f32[1,128], index: 2, kind: input, shape index: {}]
  %s3 = inlined_call_operand.hbm [shape: bf16[8,128], index: 3, kind: output, shape index: {}]
  %s4 = sld [smem:[#allocation0]]
  $region38: #{tpu_custom_call.1} parent=0
    _
  %s6 = ssub.s32 1, %s4
  %s7 = scalar_select 0, %s6, %s4
  $region1: #{tpu_custom_call.1} parent=0
    #allocation3 [shape = 'u8[2048]{0}', space=vmem, size = 0x800, scoped, tag = 'input window, operand 0, single buffered']
    #allocation4 [shape = 's32[1]{0}', space=sflag, size = 0x4, scoped, tag = 'scoped memory for tpu_custom_call.1']
    #allocation5 [shape = 's32[1]{0}', space=sflag, size = 0x4, scoped, tag = 'scoped memory for tpu_custom_call.1']
    #allocation6 [shape = 'u8[32768]{0}', space=vmem, size = 0x8000, scoped, tag = 'input window, operand 1, single buffered']
    #allocation7 [shape = 's32[1]{0}', space=sflag, size = 0x4, scoped, tag = 'scoped memory for tpu_custom_call.1']
    #allocation8 [shape = 'u8[2048]{0}', space=vmem, size = 0x800, scoped, tag = 'output window, operand 0, single buffered']
    %8 = vsyncpa [#allocation4], 0
    %9 = vsyncpa [#allocation7], 0
    %10 = vsyncpa [#allocation5], 0
    // Predicated region
    $region2: #{tpu_custom_call.1} parent=1 // pred_check
      _
    $region3: #{tpu_custom_call.1} parent=1 // pred_check_branch
      %12 = sbr.rel (0) target = $region5
    $region4: #{tpu_custom_call.1} parent=1 // pred_region
      %s14 = ssub.s32 64, 64
      %15 = vsyncadd [#allocation4], %s14
      %s17 = sshll.u32 [#allocation3], 4
      %s18 = int_to_ptr.vmem [resolvable:$true] %s17
      %20 = dma.hbm_to_vmem [thread:$0]  %s0, 64, %s18, [#allocation4]
    $region5: #{tpu_custom_call.1} parent=1 // pred_fallthru
      _
    // Predicated region
    $region6: #{tpu_custom_call.1} parent=1 // pred_check
      _
    $region7: #{tpu_custom_call.1} parent=1 // pred_check_branch
      %22 = sbr.rel (0) target = $region9
    $region8: #{tpu_custom_call.1} parent=1 // pred_region
      %s24 = ssub.s32 1024, 1024
      %25 = vsyncadd [#allocation7], %s24
      %s26 = sshll.u32 [#allocation6], 4
      %s27 = int_to_ptr.vmem [resolvable:$true] %s26
      %32 = dma.hbm_to_vmem [thread:$0]  %s1, 1024, %s27, [#allocation7], 64, 64, 4
    $region9: #{tpu_custom_call.1} parent=1 // pred_fallthru
      _
    // Predicated region
    $region10: #{tpu_custom_call.1} parent=1 // pred_check
      _
    $region11: #{tpu_custom_call.1} parent=1 // pred_check_branch
      %34 = sbr.rel (0) target = $region13
    $region12: #{tpu_custom_call.1} parent=1 // pred_region
      _
    $region13: #{tpu_custom_call.1} parent=1 // pred_fallthru
      _
    // Predicated region
    $region14: #{tpu_custom_call.1} parent=1 // pred_check
      _
    $region15: #{tpu_custom_call.1} parent=1 // pred_check_branch
      %36 = sbr.rel (0) target = $region17
    $region16: #{tpu_custom_call.1} parent=1 // pred_region
      %37 = dma.done [#allocation4], 64
    $region17: #{tpu_custom_call.1} parent=1 // pred_fallthru
      _
    // Predicated region
    $region18: #{tpu_custom_call.1} parent=1 // pred_check
      _
    $region19: #{tpu_custom_call.1} parent=1 // pred_check_branch
      %39 = sbr.rel (0) target = $region21
    $region20: #{tpu_custom_call.1} parent=1 // pred_region
      %40 = dma.done [#allocation7], 1024
    $region21: #{tpu_custom_call.1} parent=1 // pred_fallthru
      _
    %p42 = scmp.eq.s32.totalorder 0, 0
    // Predicated region
    $region22: #{tpu_custom_call.1} parent=1 // pred_check
      %p43 = pneg %p42
    $region23: #{tpu_custom_call.1} parent=1 // pred_check_branch
      %45 = sbr.rel (%p43) target = $region25
    $region24: #{tpu_custom_call.1} parent=1 // pred_region
      %46 = vst [vmem:[#allocation2] sm:$0xff] 0.0
    $region25: #{tpu_custom_call.1} parent=1 // pred_fallthru
      _
    %v47 = vld [vmem:[#allocation2] sm:$0xff]
    %v48 = vld [vmem:[#allocation3] sm:$0xf]
    %v49 = vld [vmem:[#allocation6] sm:$0xf]
    %v50 = vld [vmem:[#allocation6 + $0x4] sm:$0xf]
    %v51 = vld [vmem:[#allocation6 + $0x8] sm:$0xf]
    %v52 = vld [vmem:[#allocation6 + $0xc] sm:$0xf]
    %v53 = vld [vmem:[#allocation6 + $0x10] sm:$0xf]
    %v54 = vld [vmem:[#allocation6 + $0x14] sm:$0xf]
    %v55 = vld [vmem:[#allocation6 + $0x18] sm:$0xf]
    %v56 = vld [vmem:[#allocation6 + $0x1c] sm:$0xf]
    %v57 = vld [vmem:[#allocation6 + $0x20] sm:$0xf]
    %v58 = vld [vmem:[#allocation6 + $0x24] sm:$0xf]
    %v59 = vld [vmem:[#allocation6 + $0x28] sm:$0xf]
    %v60 = vld [vmem:[#allocation6 + $0x2c] sm:$0xf]
    %v61 = vld [vmem:[#allocation6 + $0x30] sm:$0xf]
    %v62 = vld [vmem:[#allocation6 + $0x34] sm:$0xf]
    %v63 = vld [vmem:[#allocation6 + $0x38] sm:$0xf]
    %v64 = vld [vmem:[#allocation6 + $0x3c] sm:$0xf]
    %v81 = vunpack.c.l.b16 %v49
    %v82 = vunpack.c.l.b16 %v50
    %v83 = vunpack.c.l.b16 %v51
    %v84 = vunpack.c.l.b16 %v52
    %v85 = vunpack.c.l.b16 %v53
    %v86 = vunpack.c.l.b16 %v54
    %v87 = vunpack.c.l.b16 %v55
    %v88 = vunpack.c.l.b16 %v56
    %v89 = vunpack.c.l.b16 %v57
    %v90 = vunpack.c.l.b16 %v58
    %v91 = vunpack.c.l.b16 %v59
    %v92 = vunpack.c.l.b16 %v60
    %v93 = vunpack.c.l.b16 %v61
    %v94 = vunpack.c.l.b16 %v62
    %v95 = vunpack.c.l.b16 %v63
    %v96 = vunpack.c.l.b16 %v64
    %v97 = vpack.c.b16 %v82, %v81
    %v98 = vpack.c.b16 %v84, %v83
    %v99 = vpack.c.b16 %v86, %v85
    %v100 = vpack.c.b16 %v88, %v87
    %v101 = vpack.c.b16 %v90, %v89
    %v102 = vpack.c.b16 %v92, %v91
    %v103 = vpack.c.b16 %v94, %v93
    %v104 = vpack.c.b16 %v96, %v95
    %113 = vmatprep.subr.bf16.mxu0 0
    %114 = vmatpush1.bf16.msra.mxu0 %v104
    %115 = vmatprep.subr.bf16.mxu0 0
    %116 = vmatpush1.bf16.msra.mxu0 %v103
    %117 = vmatprep.subr.bf16.mxu0 0
    %118 = vmatpush1.bf16.msra.mxu0 %v102
    %119 = vmatprep.subr.bf16.mxu0 0
    %120 = vmatpush1.bf16.msra.mxu0 %v101
    %121 = vmatprep.subr.bf16.mxu0 0
    %122 = vmatpush1.bf16.msra.mxu0 %v100
    %123 = vmatprep.subr.bf16.mxu0 0
    %124 = vmatpush1.bf16.msra.mxu0 %v99
    %125 = vmatprep.subr.bf16.mxu0 0
    %126 = vmatpush1.bf16.msra.mxu0 %v98
    %127 = vmatprep.subr.bf16.mxu0 0
    %128 = vmatpush1.bf16.msra.mxu0 %v97
    %129 = vmatprep.subr.bf16.mxu0 0
    %130 = vmatpush2.bf16.msra.mxu0 0
    %131 = vmatprep.subr.bf16.mxu0 0
    %132 = vmatpush2.bf16.msra.mxu0 0
    %133 = vmatprep.subr.bf16.mxu0 0
    %134 = vmatpush2.bf16.msra.mxu0 0
    %135 = vmatprep.subr.bf16.mxu0 0
    %136 = vmatpush2.bf16.msra.mxu0 0
    %137 = vmatprep.subr.bf16.mxu0 0
    %138 = vmatpush2.bf16.msra.mxu0 0
    %139 = vmatprep.subr.bf16.mxu0 0
    %140 = vmatpush2.bf16.msra.mxu0 0
    %141 = vmatprep.subr.bf16.mxu0 0
    %142 = vmatpush2.bf16.msra.mxu0 0
    %143 = vmatprep.subr.bf16.mxu0 0
    %144 = vmatpush2.bf16.msra.mxu0 0
    %145 = vmatprep.mubr.bf16.mxu0 0
    %146 = vmatmul.mubr.bf16.gmra.mxu0 %v48
    %v147 = vpop.f32.mrf.mxu0
    %v148 = vadd.f32 0.0, %v147
    %v149 = vpop.f32.mrf.mxu0
    %v150 = vpop.f32.mrf.mxu0
    %v151 = vpop.f32.mrf.mxu0
    %152 = vdwg.mxu0
    %v153 = vadd.f32 %v47, %v148
    %154 = vst [vmem:[#allocation2] sm:$0xff] %v153
    // Predicated region
    $region26: #{tpu_custom_call.1} parent=1 // pred_check
      %p155 = pneg %p42
    $region27: #{tpu_custom_call.1} parent=1 // pred_check_branch
      %157 = sbr.rel (%p155) target = $region29
    $region28: #{tpu_custom_call.1} parent=1 // pred_region
      %v158 = vld [vmem:[#allocation2] sm:$0xff]
      %v159 = vld [vmem:[%s2] sm:$0x1]
      %v161 = vlaneseq
      %v162 = vshrl.u32 %v161, 7
      %v163 = vsub.s32 0, %v162
      %v164 = vrot.slane %v159, %v163
      %v166 = vadd.f32 %v158, %v164
      %v167 = vpack.c.bf16 %v166, %v166
      %168 = vst [vmem:[#allocation8] sm:$0xf] %v167
    $region29: #{tpu_custom_call.1} parent=1 // pred_fallthru
      _
    // Predicated region
    $region30: #{tpu_custom_call.1} parent=1 // pred_check
      _
    $region31: #{tpu_custom_call.1} parent=1 // pred_check_branch
      %170 = sbr.rel (0) target = $region33
    $region32: #{tpu_custom_call.1} parent=1 // pred_region
      %s172 = ssub.s32 64, 64
      %173 = vsyncadd [#allocation5], %s172
      %s175 = sshll.u32 [#allocation8], 4
      %s176 = int_to_ptr.vmem [resolvable:$true] %s175
      %178 = dma.vmem_to_hbm [thread:$0]  %s176, 64, %s3, [#allocation5]
    $region33: #{tpu_custom_call.1} parent=1 // pred_fallthru
      _
    // Predicated region
    $region34: #{tpu_custom_call.1} parent=1 // pred_check
      _
    $region35: #{tpu_custom_call.1} parent=1 // pred_check_branch
      %180 = sbr.rel (0) target = $region37
    $region36: #{tpu_custom_call.1} parent=1 // pred_region
      %181 = dma.done [#allocation5], 64
    $region37: #{tpu_custom_call.1} parent=1 // pred_fallthru
      _
    %182 = vsyncpa [#allocation4], 1
    %183 = vsyncpa [#allocation7], 1
    %184 = vsyncpa [#allocation5], 1

</llo_original>
